<compile_context>
chip_gen: v5e
topology: v5e:2x2
jax: 0.10.0
libtpu: 0.0.40
codegen_flags: <defaults>
</compile_context>

<pallas_src>
import jax
import jax.numpy as jnp
from jax.experimental import pallas as pl
from jax.experimental.pallas import tpu as pltpu

INPUT_SIZE = 351
HIDDEN_SIZE = 64
OUTPUT_SIZE = 18
BN_EPS = 1e-5

# Max batch tile (rows). 4096 bf16 rows of x ~= 2.8 MiB (5.6 MiB double-buffered).
DEFAULT_MAX_BATCH_TILE = 4096


def _round_up(n, m):
    return ((n + m - 1) // m) * m


def _cdiv(a, b):
    return -(-a // b)


def _choose_batch_tile(B, tb_max):
    """Pick the batch tile:
       * multiple of 16 (bf16 sublane packing),
       * >= 2 grid steps whenever B > 16 (v7x megacore gets both TCs busy),
       * tile derived from the step count so tail-pad waste is < 16 rows/step.
    """
    tb_max = max(16, _round_up(tb_max, 16))
    n_steps = max(1, _cdiv(B, tb_max))
    if n_steps == 1 and B > 16:
        n_steps = 2
    tb = min(tb_max, _round_up(_cdiv(B, n_steps), 16))
    return tb


def _mlp_kernel(x_ref, w1_ref, b1_ref, w2_ref, b2_ref, w3_ref, b3_ref, o_ref):
    x = x_ref[...]                                                   # bf16 (tb, 351)

    # fc1 + relu (bf16 operands, f32 accumulate)
    h1 = jnp.dot(x, w1_ref[...], preferred_element_type=jnp.float32) + b1_ref[...]
    h1 = jnp.maximum(h1, 0.0).astype(jnp.bfloat16)

    # dropout (eval) -> identity

    # fc2 + relu
    h2 = jnp.dot(h1, w2_ref[...], preferred_element_type=jnp.float32) + b2_ref[...]
    h2 = jnp.maximum(h2, 0.0).astype(jnp.bfloat16)

    # fc3 (BatchNorm running-stats affine already folded into w3/b3), f32 logits
    logits = jnp.dot(h2, w3_ref[...], preferred_element_type=jnp.float32) + b3_ref[...]

    # softmax over dim=1 (last axis); exact reciprocal on the EUP.
    m = jnp.max(logits, axis=-1, keepdims=True)
    e = jnp.exp(logits - m)
    inv = pl.reciprocal(jnp.sum(e, axis=-1, keepdims=True), approx=False)
    o_ref[...] = (e * inv).astype(o_ref.dtype)


def rubiks_move_predictor(x, params, tb_max=DEFAULT_MAX_BATCH_TILE):
    """x: (B, 351) float32 -> (B, 18) float32 probabilities."""
    (w1, b1, w2, b2, bn_scale, bn_shift, w3, b3) = params
    B = x.shape[0]

    # Exact eval-mode fold of BatchNorm into fc3.
    w3f = bn_scale.reshape(-1, 1) * w3          # (H, O)
    b3f = bn_shift @ w3 + b3                    # (1, O)

    # bf16 on MXU operands (x is the binding HBM-read stream); biases stay f32.
    x_bf = x.astype(jnp.bfloat16)
    w1_bf = w1.astype(jnp.bfloat16)
    w2_bf = w2.astype(jnp.bfloat16)
    w3f_bf = w3f.astype(jnp.bfloat16)
    b1_f = b1.astype(jnp.float32)
    b2_f = b2.astype(jnp.float32)
    b3f_f = b3f.astype(jnp.float32)

    # Batch tiling with bounded tail padding (padded rows are sliced off below).
    tb = _choose_batch_tile(B, tb_max)
    Bp = _round_up(B, tb)
    if Bp != B:
        x_bf = jnp.pad(x_bf, ((0, Bp - B), (0, 0)))
    grid = (Bp // tb,)

    # VMEM budget: double-buffered x/out tiles + resident weights + temporaries.
    x_tile_b = tb * INPUT_SIZE * 2                       # bf16 x tile
    out_tile_b = tb * OUTPUT_SIZE * 4                    # f32 out tile
    weights_b = (2 * (INPUT_SIZE * HIDDEN_SIZE + HIDDEN_SIZE * HIDDEN_SIZE
                      + HIDDEN_SIZE * OUTPUT_SIZE)
                 + 4 * (2 * HIDDEN_SIZE + OUTPUT_SIZE))
    temps_b = tb * 4 * (2 * HIDDEN_SIZE + 4 * OUTPUT_SIZE)
    vmem_needed = 2 * (x_tile_b + out_tile_b) + 2 * weights_b + temps_b
    vmem_limit = int(min(max(2 * vmem_needed, 32 << 20), 56 << 20))  # <= v7x physical

    # Advisory cost estimate for the surrounding XLA schedule.
    flops = 2 * Bp * (INPUT_SIZE * HIDDEN_SIZE + HIDDEN_SIZE * HIDDEN_SIZE
                      + HIDDEN_SIZE * OUTPUT_SIZE)
    bytes_accessed = Bp * INPUT_SIZE * 2 + Bp * OUTPUT_SIZE * 4 + weights_b
    cost = pl.CostEstimate(flops=flops,
                           transcendentals=Bp * (OUTPUT_SIZE + 1),
                           bytes_accessed=bytes_accessed)

    const = lambda i: (0, 0)   # weights/biases: same block every step -> VMEM-resident
    out = pl.pallas_call(
        _mlp_kernel,
        out_shape=jax.ShapeDtypeStruct((Bp, OUTPUT_SIZE), jnp.float32),
        grid=grid,
        in_specs=[
            pl.BlockSpec((tb, INPUT_SIZE), lambda i: (i, 0)),          # x (pipelined)
            pl.BlockSpec((INPUT_SIZE, HIDDEN_SIZE), const),            # W1 (bf16)
            pl.BlockSpec((1, HIDDEN_SIZE), const),                     # b1
            pl.BlockSpec((HIDDEN_SIZE, HIDDEN_SIZE), const),           # W2 (bf16)
            pl.BlockSpec((1, HIDDEN_SIZE), const),                     # b2
            pl.BlockSpec((HIDDEN_SIZE, OUTPUT_SIZE), const),           # W3 (BN-folded, bf16)
            pl.BlockSpec((1, OUTPUT_SIZE), const),                     # b3 (BN-folded)
        ],
        out_specs=pl.BlockSpec((tb, OUTPUT_SIZE), lambda i: (i, 0)),
        compiler_params=pltpu.CompilerParams(
            dimension_semantics=("parallel",),                         # 2 TCs on v7x
            vmem_limit_bytes=vmem_limit,
        ),
        cost_estimate=cost,
    )(x_bf, w1_bf, b1_f, w2_bf, b2_f, w3f_bf, b3f_f)

    return out[:B]


def init_params(key):
    """Deterministic parameter init mirroring the nn.Module shapes.

    Weights are stored transposed: (in_features, out_features).
    Biases / BN vectors stored as (1, features) for clean lane layout.
    """
    k = jax.random.split(key, 8)

    def uniform(kk, shape, fan_in):
        bound = 1.0 / jnp.sqrt(fan_in)
        return jax.random.uniform(kk, shape, jnp.float32, -bound, bound)

    w1 = uniform(k[0], (INPUT_SIZE, HIDDEN_SIZE), INPUT_SIZE)
    b1 = uniform(k[1], (1, HIDDEN_SIZE), INPUT_SIZE)
    w2 = uniform(k[2], (HIDDEN_SIZE, HIDDEN_SIZE), HIDDEN_SIZE)
    b2 = uniform(k[3], (1, HIDDEN_SIZE), HIDDEN_SIZE)
    w3 = uniform(k[4], (HIDDEN_SIZE, OUTPUT_SIZE), HIDDEN_SIZE)
    b3 = uniform(k[5], (1, OUTPUT_SIZE), HIDDEN_SIZE)

    # BatchNorm1d(hidden_size): gamma, beta, running_mean, running_var
    gamma = jnp.ones((1, HIDDEN_SIZE), jnp.float32)
    beta = jnp.zeros((1, HIDDEN_SIZE), jnp.float32)
    running_mean = 0.1 * jax.random.normal(k[6], (1, HIDDEN_SIZE), jnp.float32)
    running_var = 1.0 + 0.1 * jax.random.uniform(k[7], (1, HIDDEN_SIZE), jnp.float32)

    # Running-stats affine form (exact in eval mode).
    bn_scale = gamma / jnp.sqrt(running_var + BN_EPS)
    bn_shift = beta - running_mean * bn_scale

    return (w1, b1, w2, b2, bn_scale, bn_shift, w3, b3)


def reference_forward(x, params):
    """Pure-JAX f32 reference in the original (un-folded) form."""
    (w1, b1, w2, b2, bn_scale, bn_shift, w3, b3) = params
    h1 = jnp.maximum(x @ w1 + b1, 0.0)
    h2 = jnp.maximum(h1 @ w2 + b2, 0.0)
    h2 = h2 * bn_scale + bn_shift
    logits = h2 @ w3 + b3
    return jax.nn.softmax(logits, axis=1)


def reference_forward_matched(x, params):
    """Pure-JAX reference matching the kernel's precision (bf16 operands,
    f32 accumulate, BN folded into fc3)."""
    (w1, b1, w2, b2, bn_scale, bn_shift, w3, b3) = params
    w3f = bn_scale.reshape(-1, 1) * w3
    b3f = bn_shift @ w3 + b3
    bf = jnp.bfloat16
    h1 = jnp.dot(x.astype(bf), w1.astype(bf), preferred_element_type=jnp.float32) + b1
    h1 = jnp.maximum(h1, 0.0).astype(bf)
    h2 = jnp.dot(h1, w2.astype(bf), preferred_element_type=jnp.float32) + b2
    h2 = jnp.maximum(h2, 0.0).astype(bf)
    logits = jnp.dot(h2, w3f.astype(bf), preferred_element_type=jnp.float32) + b3f
    return jax.nn.softmax(logits, axis=1)


if __name__ == "__main__":
    key = jax.random.PRNGKey(0)
    pkey, xkey = jax.random.split(key)

    params = init_params(pkey)

    # Small test: B=20 -> tile selector picks tb=16 (multiple of 16, >=2 grid
    # steps), batch padded to 32 and sliced back; exercises the pipelined grid
    # and the padded-tail path.
    B = 20
    x = jax.random.normal(xkey, (B, INPUT_SIZE), jnp.float32)

    out = rubiks_move_predictor(x, params)
    out = jax.block_until_ready(out)

    assert out.shape == (B, OUTPUT_SIZE)
    assert bool(jnp.all(jnp.isfinite(out)))
    # Exact softmax normalization (exact reciprocal).
    assert jnp.allclose(jnp.sum(out, axis=1), 1.0, atol=1e-3)
    # Tight check vs a reference with the kernel's exact mixed precision.
    ref_matched = reference_forward_matched(x, params)
    assert jnp.allclose(out, ref_matched, atol=5e-3, rtol=5e-3)
    # Loose check vs the full-f32, un-folded reference (bf16 matmul rounding).
    ref_f32 = reference_forward(x, params)
    assert jnp.allclose(out, ref_f32, atol=5e-2)

    print("KERNEL_OK")
</pallas_src>

<mosaic_0001>
module attributes {stable_mosaic.version = 11 : i64} {
  func.func @_mlp_kernel(%arg0: i32, %arg1: memref<16x351xbf16, #tpu.memory_space<vmem>>, %arg2: memref<351x64xbf16, #tpu.memory_space<vmem>>, %arg3: memref<1x64xf32, #tpu.memory_space<vmem>>, %arg4: memref<64x64xbf16, #tpu.memory_space<vmem>>, %arg5: memref<1x64xf32, #tpu.memory_space<vmem>>, %arg6: memref<64x18xbf16, #tpu.memory_space<vmem>>, %arg7: memref<1x18xf32, #tpu.memory_space<vmem>>, %arg8: memref<16x18xf32, #tpu.memory_space<vmem>>) attributes {dimension_semantics = [#tpu.dimension_semantics<parallel>], iteration_bounds = array<i64: 2>, scalar_prefetch = 0 : i64, scratch_operands = 0 : i64, tpu.core_type = #tpu.core_type<tc>, window_params = [{transform_indices = @transform_0, window_bounds = array<i64: 16, 351>}, {pipeline_mode = #tpu.pipeline_mode<synchronous>, transform_indices = @transform_1, window_bounds = array<i64: 351, 64>}, {pipeline_mode = #tpu.pipeline_mode<synchronous>, transform_indices = @transform_2, window_bounds = array<i64: 1, 64>}, {pipeline_mode = #tpu.pipeline_mode<synchronous>, transform_indices = @transform_3, window_bounds = array<i64: 64, 64>}, {pipeline_mode = #tpu.pipeline_mode<synchronous>, transform_indices = @transform_4, window_bounds = array<i64: 1, 64>}, {pipeline_mode = #tpu.pipeline_mode<synchronous>, transform_indices = @transform_5, window_bounds = array<i64: 64, 18>}, {pipeline_mode = #tpu.pipeline_mode<synchronous>, transform_indices = @transform_6, window_bounds = array<i64: 1, 18>}, {transform_indices = @transform_7, window_bounds = array<i64: 16, 18>}]} {
    %c0 = arith.constant 0 : index
    %c0_0 = arith.constant 0 : index
    %0 = vector.load %arg1[%c0, %c0_0] : memref<16x351xbf16, #tpu.memory_space<vmem>>, vector<16x351xbf16>
    %c0_1 = arith.constant 0 : index
    %c0_2 = arith.constant 0 : index
    %1 = vector.load %arg2[%c0_1, %c0_2] : memref<351x64xbf16, #tpu.memory_space<vmem>>, vector<351x64xbf16>
    %cst = arith.constant dense<0.000000e+00> : vector<16x64xf32>
    %2 = tpu.matmul %0, %1, %cst {dimension_numbers = #tpu.dot_dimension_numbers<[1], [0], [0], [1], [0, 0, 1, 1], [], []>} : vector<16x351xbf16>, vector<351x64xbf16>, vector<16x64xf32> -> vector<16x64xf32>
    %c0_3 = arith.constant 0 : index
    %c0_4 = arith.constant 0 : index
    %3 = vector.load %arg3[%c0_3, %c0_4] : memref<1x64xf32, #tpu.memory_space<vmem>>, vector<1x64xf32>
    %4 = vector.broadcast %3 : vector<1x64xf32> to vector<16x64xf32>
    %5 = arith.addf %2, %4 : vector<16x64xf32>
    %cst_5 = arith.constant 0.000000e+00 : f32
    %6 = vector.broadcast %cst_5 : f32 to vector<16x64xf32>
    %7 = arith.maximumf %5, %6 : vector<16x64xf32>
    %8 = arith.truncf %7 : vector<16x64xf32> to vector<16x64xbf16>
    %c0_6 = arith.constant 0 : index
    %c0_7 = arith.constant 0 : index
    %9 = vector.load %arg4[%c0_6, %c0_7] : memref<64x64xbf16, #tpu.memory_space<vmem>>, vector<64x64xbf16>
    %cst_8 = arith.constant dense<0.000000e+00> : vector<16x64xf32>
    %10 = tpu.matmul %8, %9, %cst_8 {dimension_numbers = #tpu.dot_dimension_numbers<[1], [0], [0], [1], [0, 0, 1, 1], [], []>} : vector<16x64xbf16>, vector<64x64xbf16>, vector<16x64xf32> -> vector<16x64xf32>
    %c0_9 = arith.constant 0 : index
    %c0_10 = arith.constant 0 : index
    %11 = vector.load %arg5[%c0_9, %c0_10] : memref<1x64xf32, #tpu.memory_space<vmem>>, vector<1x64xf32>
    %12 = vector.broadcast %11 : vector<1x64xf32> to vector<16x64xf32>
    %13 = arith.addf %10, %12 : vector<16x64xf32>
    %cst_11 = arith.constant 0.000000e+00 : f32
    %14 = vector.broadcast %cst_11 : f32 to vector<16x64xf32>
    %15 = arith.maximumf %13, %14 : vector<16x64xf32>
    %16 = arith.truncf %15 : vector<16x64xf32> to vector<16x64xbf16>
    %c0_12 = arith.constant 0 : index
    %c0_13 = arith.constant 0 : index
    %17 = vector.load %arg6[%c0_12, %c0_13] : memref<64x18xbf16, #tpu.memory_space<vmem>>, vector<64x18xbf16>
    %cst_14 = arith.constant dense<0.000000e+00> : vector<16x18xf32>
    %18 = tpu.matmul %16, %17, %cst_14 {dimension_numbers = #tpu.dot_dimension_numbers<[1], [0], [0], [1], [0, 0, 1, 1], [], []>} : vector<16x64xbf16>, vector<64x18xbf16>, vector<16x18xf32> -> vector<16x18xf32>
    %c0_15 = arith.constant 0 : index
    %c0_16 = arith.constant 0 : index
    %19 = vector.load %arg7[%c0_15, %c0_16] : memref<1x18xf32, #tpu.memory_space<vmem>>, vector<1x18xf32>
    %20 = vector.broadcast %19 : vector<1x18xf32> to vector<16x18xf32>
    %21 = arith.addf %18, %20 : vector<16x18xf32>
    %cst_17 = arith.constant dense<0xFF800000> : vector<16xf32>
    %22 = vector.multi_reduction <maximumf>, %21, %cst_17 [1] : vector<16x18xf32> to vector<16xf32>
    %23 = vector.shape_cast %22 : vector<16xf32> to vector<16x1xf32>
    %24 = vector.broadcast %23 : vector<16x1xf32> to vector<16x18xf32>
    %25 = arith.subf %21, %24 : vector<16x18xf32>
    %26 = math.exp %25 : vector<16x18xf32>
    %cst_18 = arith.constant dense<0.000000e+00> : vector<16xf32>
    %27 = vector.multi_reduction <add>, %26, %cst_18 [1] : vector<16x18xf32> to vector<16xf32>
    %28 = vector.shape_cast %27 : vector<16xf32> to vector<16x1xf32>
    %29 = tpu.reciprocal %28 : vector<16x1xf32> -> vector<16x1xf32>
    %30 = vector.broadcast %29 : vector<16x1xf32> to vector<16x18xf32>
    %31 = arith.mulf %26, %30 : vector<16x18xf32>
    %c0_19 = arith.constant 0 : index
    %c0_20 = arith.constant 0 : index
    %32 = vector.load %arg8[%c0_19, %c0_20] : memref<16x18xf32, #tpu.memory_space<vmem>>, vector<16x18xf32>
    tpu.vector_store %arg8[%c0_19, %c0_20], %31 {strides = array<i32>} : memref<16x18xf32, #tpu.memory_space<vmem>>, vector<16x18xf32>,
    return
  }
  func.func @transform_0(%arg0: i32) -> (i32, i32) {
    %c0_i32 = arith.constant 0 : i32
    %c0_i32_0 = arith.constant 0 : i32
    return %arg0, %c0_i32 : i32, i32
  }
  func.func @transform_1(%arg0: i32) -> (i32, i32) {
    %c0_i32 = arith.constant 0 : i32
    %c0_i32_0 = arith.constant 0 : i32
    %c0_i32_1 = arith.constant 0 : i32
    return %c0_i32, %c0_i32_0 : i32, i32
  }
  func.func @transform_2(%arg0: i32) -> (i32, i32) {
    %c0_i32 = arith.constant 0 : i32
    %c0_i32_0 = arith.constant 0 : i32
    %c0_i32_1 = arith.constant 0 : i32
    return %c0_i32, %c0_i32_0 : i32, i32
  }
  func.func @transform_3(%arg0: i32) -> (i32, i32) {
    %c0_i32 = arith.constant 0 : i32
    %c0_i32_0 = arith.constant 0 : i32
    %c0_i32_1 = arith.constant 0 : i32
    return %c0_i32, %c0_i32_0 : i32, i32
  }
  func.func @transform_4(%arg0: i32) -> (i32, i32) {
    %c0_i32 = arith.constant 0 : i32
    %c0_i32_0 = arith.constant 0 : i32
    %c0_i32_1 = arith.constant 0 : i32
    return %c0_i32, %c0_i32_0 : i32, i32
  }
  func.func @transform_5(%arg0: i32) -> (i32, i32) {
    %c0_i32 = arith.constant 0 : i32
    %c0_i32_0 = arith.constant 0 : i32
    %c0_i32_1 = arith.constant 0 : i32
    return %c0_i32, %c0_i32_0 : i32, i32
  }
  func.func @transform_6(%arg0: i32) -> (i32, i32) {
    %c0_i32 = arith.constant 0 : i32
    %c0_i32_0 = arith.constant 0 : i32
    %c0_i32_1 = arith.constant 0 : i32
    return %c0_i32, %c0_i32_0 : i32, i32
  }
  func.func @transform_7(%arg0: i32) -> (i32, i32) {
    %c0_i32 = arith.constant 0 : i32
    %c0_i32_0 = arith.constant 0 : i32
    return %arg0, %c0_i32 : i32, i32
  }
}

</mosaic_0001>

<llo_original>
// kernel: tpu_custom_call.1
$region0: #{tpu_custom_call.1}
  #allocation0 [shape = 'u32[]', space=smem, size = 0x4, offset = 0x4, fixed_abs, tag = 'smem constant byte address 0x4 - core index']
  #allocation1 [shape = 'u32[72,128]{1,0:T(1,128)}', space=vmem, size = 0x9000, scoped, tag = 'internal scratch']
  %s0 = inlined_call_operand.vmem [shape: bf16[32,351], index: 0, kind: input, shape index: {}]
  %s1 = inlined_call_operand.vmem [shape: bf16[351,64], index: 1, kind: input, shape index: {}]
  %s2 = inlined_call_operand.vmem [shape: f32[1,64], index: 2, kind: input, shape index: {}]
  %s3 = inlined_call_operand.vmem [shape: bf16[64,64], index: 3, kind: input, shape index: {}]
  %s4 = inlined_call_operand.vmem [shape: f32[1,64], index: 4, kind: input, shape index: {}]
  %s5 = inlined_call_operand.vmem [shape: bf16[64,18], index: 5, kind: input, shape index: {}]
  %s6 = inlined_call_operand.vmem [shape: f32[1,18], index: 6, kind: input, shape index: {}]
  %s7 = inlined_call_operand.vmem [shape: f32[32,18], index: 7, kind: output, shape index: {}]
  %s8 = sld [smem:[#allocation0]]
  $region61: #{tpu_custom_call.1} parent=0
    _
  %s10 = ssub.s32 1, %s8
  %s11 = scalar_select 0, %s10, %s8
  loop: start=0, step=1, limit=4
  $region2: #{tpu_custom_call.1} parent=0 // loop_pre_header
    _
  $region3: #{tpu_custom_call.1} parent=0 // loop_header
    %s13 = sphi 0, %s17
    %p14 = scmp.ge.s32.totalorder %s13, 4
    %s23 = sphi 0, %s25
    %s26 = sphi 0, %s23
    %s27 = sphi 0, %s26
    %s43 = sphi 0, %s27
    %s47 = sphi 0, %s47
    %s49 = sphi 0, %s47
    %s50 = sphi 0, %s49
    %s64 = sphi 0, %s50
    %s68 = sphi 0, %s68
    %s70 = sphi 0, %s68
    %s71 = sphi 0, %s70
    %s85 = sphi 0, %s71
    %s89 = sphi 0, %s89
    %s91 = sphi 0, %s89
    %s92 = sphi 0, %s91
    %s106 = sphi 0, %s92
    %s110 = sphi 0, %s110
    %s112 = sphi 0, %s110
    %s113 = sphi 0, %s112
    %s127 = sphi 0, %s113
    %s131 = sphi 0, %s131
    %s133 = sphi 0, %s131
    %s134 = sphi 0, %s133
    %s148 = sphi 0, %s134
    %s152 = sphi 0, %s152
    %s154 = sphi 0, %s152
    %s155 = sphi 0, %s154
    %s169 = sphi 0, %s155
    %s175 = sphi 0, %s177
    %s178 = sphi 0, %s175
    %s179 = sphi 0, %s178
    %s195 = sphi 0, %s179
  $region4: #{tpu_custom_call.1} parent=0 // loop_header_branch
    %16 = sbr.rel (%p14) target = $region8
  $region5: #{tpu_custom_call.1} parent=0 // loop_body
    %s18 = ssub.s32 %s13, 1
    %s19 = ssub.s32 %s13, 2
    %s20 = sadd.s32 %s13, 1
    %s21 = ssub.s32 %s13, %s20
    %p22 = scmp.eq.s32.totalorder %s21, 0
    %s24 = sadd.s32 %s23, 1
    %s25 = scalar_select %p22, %s23, %s24
    %p28 = pneg %p22
    %p29 = scmp.eq.s32.totalorder %s13, 1
    %p30 = por %p28, %p29
    %p31 = scmp.ne.s32.totalorder %s23, %s26
    %p32 = scmp.eq.s32.totalorder %s13, 0
    %p33 = por %p31, %p32
    %p34 = scmp.ne.s32.totalorder %s23, %s26
    %p35 = scmp.eq.s32.totalorder %s18, 1
    %p36 = por %p34, %p35
    %p37 = scmp.ne.s32.totalorder %s26, %s27
    %p38 = scmp.eq.s32.totalorder %s18, 0
    %p39 = por %p37, %p38
    %p40 = scmp.ne.s32.totalorder %s26, %s27
    %p41 = scmp.eq.s32.totalorder %s19, 1
    %p42 = por %p40, %p41
    %p44 = scmp.ne.s32.totalorder %s27, %s43
    %p45 = scmp.eq.s32.totalorder %s19, 0
    %p46 = por %p44, %p45
    %s48 = sadd.s32 %s47, 1
    %p51 = scmp.eq.s32.totalorder %s13, 1
    %p52 = scmp.ne.s32.totalorder %s47, %s49
    %p53 = scmp.eq.s32.totalorder %s13, 0
    %p54 = por %p52, %p53
    %p55 = scmp.ne.s32.totalorder %s47, %s49
    %p56 = scmp.eq.s32.totalorder %s18, 1
    %p57 = por %p55, %p56
    %p58 = scmp.ne.s32.totalorder %s49, %s50
    %p59 = scmp.eq.s32.totalorder %s18, 0
    %p60 = por %p58, %p59
    %p61 = scmp.ne.s32.totalorder %s49, %s50
    %p62 = scmp.eq.s32.totalorder %s19, 1
    %p63 = por %p61, %p62
    %p65 = scmp.ne.s32.totalorder %s50, %s64
    %p66 = scmp.eq.s32.totalorder %s19, 0
    %p67 = por %p65, %p66
    %s69 = sadd.s32 %s68, 1
    %p72 = scmp.eq.s32.totalorder %s13, 1
    %p73 = scmp.ne.s32.totalorder %s68, %s70
    %p74 = scmp.eq.s32.totalorder %s13, 0
    %p75 = por %p73, %p74
    %p76 = scmp.ne.s32.totalorder %s68, %s70
    %p77 = scmp.eq.s32.totalorder %s18, 1
    %p78 = por %p76, %p77
    %p79 = scmp.ne.s32.totalorder %s70, %s71
    %p80 = scmp.eq.s32.totalorder %s18, 0
    %p81 = por %p79, %p80
    %p82 = scmp.ne.s32.totalorder %s70, %s71
    %p83 = scmp.eq.s32.totalorder %s19, 1
    %p84 = por %p82, %p83
    %p86 = scmp.ne.s32.totalorder %s71, %s85
    %p87 = scmp.eq.s32.totalorder %s19, 0
    %p88 = por %p86, %p87
    %s90 = sadd.s32 %s89, 1
    %p93 = scmp.eq.s32.totalorder %s13, 1
    %p94 = scmp.ne.s32.totalorder %s89, %s91
    %p95 = scmp.eq.s32.totalorder %s13, 0
    %p96 = por %p94, %p95
    %p97 = scmp.ne.s32.totalorder %s89, %s91
    %p98 = scmp.eq.s32.totalorder %s18, 1
    %p99 = por %p97, %p98
    %p100 = scmp.ne.s32.totalorder %s91, %s92
    %p101 = scmp.eq.s32.totalorder %s18, 0
    %p102 = por %p100, %p101
    %p103 = scmp.ne.s32.totalorder %s91, %s92
    %p104 = scmp.eq.s32.totalorder %s19, 1
    %p105 = por %p103, %p104
    %p107 = scmp.ne.s32.totalorder %s92, %s106
    %p108 = scmp.eq.s32.totalorder %s19, 0
    %p109 = por %p107, %p108
    %s111 = sadd.s32 %s110, 1
    %p114 = scmp.eq.s32.totalorder %s13, 1
    %p115 = scmp.ne.s32.totalorder %s110, %s112
    %p116 = scmp.eq.s32.totalorder %s13, 0
    %p117 = por %p115, %p116
    %p118 = scmp.ne.s32.totalorder %s110, %s112
    %p119 = scmp.eq.s32.totalorder %s18, 1
    %p120 = por %p118, %p119
    %p121 = scmp.ne.s32.totalorder %s112, %s113
    %p122 = scmp.eq.s32.totalorder %s18, 0
    %p123 = por %p121, %p122
    %p124 = scmp.ne.s32.totalorder %s112, %s113
    %p125 = scmp.eq.s32.totalorder %s19, 1
    %p126 = por %p124, %p125
    %p128 = scmp.ne.s32.totalorder %s113, %s127
    %p129 = scmp.eq.s32.totalorder %s19, 0
    %p130 = por %p128, %p129
    %s132 = sadd.s32 %s131, 1
    %p135 = scmp.eq.s32.totalorder %s13, 1
    %p136 = scmp.ne.s32.totalorder %s131, %s133
    %p137 = scmp.eq.s32.totalorder %s13, 0
    %p138 = por %p136, %p137
    %p139 = scmp.ne.s32.totalorder %s131, %s133
    %p140 = scmp.eq.s32.totalorder %s18, 1
    %p141 = por %p139, %p140
    %p142 = scmp.ne.s32.totalorder %s133, %s134
    %p143 = scmp.eq.s32.totalorder %s18, 0
    %p144 = por %p142, %p143
    %p145 = scmp.ne.s32.totalorder %s133, %s134
    %p146 = scmp.eq.s32.totalorder %s19, 1
    %p147 = por %p145, %p146
    %p149 = scmp.ne.s32.totalorder %s134, %s148
    %p150 = scmp.eq.s32.totalorder %s19, 0
    %p151 = por %p149, %p150
    %s153 = sadd.s32 %s152, 1
    %p156 = scmp.eq.s32.totalorder %s13, 1
    %p157 = scmp.ne.s32.totalorder %s152, %s154
    %p158 = scmp.eq.s32.totalorder %s13, 0
    %p159 = por %p157, %p158
    %p160 = scmp.ne.s32.totalorder %s152, %s154
    %p161 = scmp.eq.s32.totalorder %s18, 1
    %p162 = por %p160, %p161
    %p163 = scmp.ne.s32.totalorder %s154, %s155
    %p164 = scmp.eq.s32.totalorder %s18, 0
    %p165 = por %p163, %p164
    %p166 = scmp.ne.s32.totalorder %s154, %s155
    %p167 = scmp.eq.s32.totalorder %s19, 1
    %p168 = por %p166, %p167
    %p170 = scmp.ne.s32.totalorder %s155, %s169
    %p171 = scmp.eq.s32.totalorder %s19, 0
    %p172 = por %p170, %p171
    %s173 = ssub.s32 %s13, %s20
    %p174 = scmp.eq.s32.totalorder %s173, 0
    %s176 = sadd.s32 %s175, 1
    %s177 = scalar_select %p174, %s175, %s176
    %p180 = pneg %p174
    %p181 = scmp.eq.s32.totalorder %s13, 1
    %p182 = por %p180, %p181
    %p183 = scmp.ne.s32.totalorder %s175, %s178
    %p184 = scmp.eq.s32.totalorder %s13, 0
    %p185 = por %p183, %p184
    %p186 = scmp.ne.s32.totalorder %s175, %s178
    %p187 = scmp.eq.s32.totalorder %s18, 1
    %p188 = por %p186, %p187
    %p189 = scmp.ne.s32.totalorder %s178, %s179
    %p190 = scmp.eq.s32.totalorder %s18, 0
    %p191 = por %p189, %p190
    %p192 = scmp.ne.s32.totalorder %s178, %s179
    %p193 = scmp.eq.s32.totalorder %s19, 1
    %p194 = por %p192, %p193
    %p196 = scmp.ne.s32.totalorder %s179, %s195
    %p197 = scmp.eq.s32.totalorder %s19, 0
    %p198 = por %p196, %p197
    %p199 = scmp.le.s32.totalorder 1, %s13
    %p200 = scmp.lt.s32.totalorder %s13, 3
    %p201 = pnand %p199, %p200
    %p202 = pneg %p201
    // Predicated region
    $region9: #{tpu_custom_call.1} parent=5 // pred_check
      _
    $region10: #{tpu_custom_call.1} parent=5 // pred_check_branch
      %204 = sbr.rel (%p201) target = $region12
    $region11: #{tpu_custom_call.1} parent=5 // pred_region
      %s205 = ssub.s32 %s13, 1
      // Predicated region
      $region13: #{tpu_custom_call.1} parent=11 // pred_check
        %p206 = pneg %p60
      $region14: #{tpu_custom_call.1} parent=11 // pred_check_branch
        %208 = sbr.rel (%p206) target = $region16
      $region15: #{tpu_custom_call.1} parent=11 // pred_region
        _
      $region16: #{tpu_custom_call.1} parent=11 // pred_fallthru
        _
      // Predicated region
      $region17: #{tpu_custom_call.1} parent=11 // pred_check
        %p209 = pneg %p81
      $region18: #{tpu_custom_call.1} parent=11 // pred_check_branch
        %211 = sbr.rel (%p209) target = $region20
      $region19: #{tpu_custom_call.1} parent=11 // pred_region
        _
      $region20: #{tpu_custom_call.1} parent=11 // pred_fallthru
        _
      // Predicated region
      $region21: #{tpu_custom_call.1} parent=11 // pred_check
        %p212 = pneg %p102
      $region22: #{tpu_custom_call.1} parent=11 // pred_check_branch
        %214 = sbr.rel (%p212) target = $region24
      $region23: #{tpu_custom_call.1} parent=11 // pred_region
        _
      $region24: #{tpu_custom_call.1} parent=11 // pred_fallthru
        _
      // Predicated region
      $region25: #{tpu_custom_call.1} parent=11 // pred_check
        %p215 = pneg %p123
      $region26: #{tpu_custom_call.1} parent=11 // pred_check_branch
        %217 = sbr.rel (%p215) target = $region28
      $region27: #{tpu_custom_call.1} parent=11 // pred_region
        _
      $region28: #{tpu_custom_call.1} parent=11 // pred_fallthru
        _
      // Predicated region
      $region29: #{tpu_custom_call.1} parent=11 // pred_check
        %p218 = pneg %p144
      $region30: #{tpu_custom_call.1} parent=11 // pred_check_branch
        %220 = sbr.rel (%p218) target = $region32
      $region31: #{tpu_custom_call.1} parent=11 // pred_region
        _
      $region32: #{tpu_custom_call.1} parent=11 // pred_fallthru
        _
      // Predicated region
      $region33: #{tpu_custom_call.1} parent=11 // pred_check
        %p221 = pneg %p165
      $region34: #{tpu_custom_call.1} parent=11 // pred_check_branch
        %223 = sbr.rel (%p221) target = $region36
      $region35: #{tpu_custom_call.1} parent=11 // pred_region
        _
      $region36: #{tpu_custom_call.1} parent=11 // pred_fallthru
        _
    $region12: #{tpu_custom_call.1} parent=5 // pred_fallthru
      _
    %p224 = scmp.lt.s32.totalorder %s13, 2
    // Predicated region
    $region37: #{tpu_custom_call.1} parent=5 // pred_check
      %p225 = pneg %p224
    $region38: #{tpu_custom_call.1} parent=5 // pred_check_branch
      %227 = sbr.rel (%p225) target = $region40
    $region39: #{tpu_custom_call.1} parent=5 // pred_region
      // Predicated region
      $region41: #{tpu_custom_call.1} parent=39 // pred_check
        %p228 = pneg %p33
      $region42: #{tpu_custom_call.1} parent=39 // pred_check_branch
        %230 = sbr.rel (%p228) target = $region44
      $region43: #{tpu_custom_call.1} parent=39 // pred_region
        %s231 = smul.u32 2, %s13
        %p232 = scmp.lt.s32.totalorder %s231, 3
        %s233 = scalar_select %p232, %s231, 3
        %s234 = smul.addr %s233, 3
        %s235 = smul.addr %s234, 4
        %s236 = scalar_lea.vmem %s0, %s235
        %s237 = smul.u32 2, %s13
      $region44: #{tpu_custom_call.1} parent=39 // pred_fallthru
        _
    $region40: #{tpu_custom_call.1} parent=5 // pred_fallthru
      _
    %p238 = scmp.le.s32.totalorder 1, %s13
    %p239 = scmp.lt.s32.totalorder %s13, 3
    %p240 = pnand %p238, %p239
    %p241 = pneg %p240
    // Predicated region
    $region45: #{tpu_custom_call.1} parent=5 // pred_check
      _
    $region46: #{tpu_custom_call.1} parent=5 // pred_check_branch
      %243 = sbr.rel (%p240) target = $region48
    $region47: #{tpu_custom_call.1} parent=5 // pred_region
      %s244 = ssub.s32 %s13, 1
      %s245 = smul.u32 2, %s18
      %p246 = scmp.lt.s32.totalorder %s245, 3
      %s247 = scalar_select %p246, %s245, 3
      %s248 = smul.addr %s247, 3
      %s249 = smul.addr %s248, 4
      %s250 = scalar_lea.vmem %s0, %s249
      %p251 = pneg %p39
      %p252 = pneg %p36
      %p253 = pneg %p60
      %p254 = pneg %p57
      %p255 = pneg %p81
      %p256 = pneg %p78
      %p257 = pneg %p102
      %p258 = pneg %p99
      %p259 = pneg %p123
      %p260 = pneg %p120
      %p261 = pneg %p144
      %p262 = pneg %p141
      %p263 = pneg %p165
      %p264 = pneg %p162
      %p265 = pneg %p191
      %p266 = pneg %p188
      %s267 = smul.u32 2, %s18
      %p268 = scmp.lt.s32.totalorder %s267, 3
      %s269 = scalar_select %p268, %s267, 3
      %s270 = smul.addr %s269, 8
      %s271 = scalar_lea.vmem %s7, %s270
      %s272 = smul.u32 2, %s18
      %p273 = scmp.lt.s32.totalorder %s272, 3
      %s274 = scalar_select %p273, %s272, 3
      %s275 = smul.addr %s274, 3
      %s276 = smul.addr %s275, 4
      %s277 = scalar_lea.vmem %s0, %s276
      %s278 = smul.u32 2, %s18
      %s279 = smul.u32 2, %s18
      %p280 = scmp.lt.s32.totalorder %s279, 3
      %s281 = scalar_select %p280, %s279, 3
      %s282 = smul.addr %s281, 8
      %s283 = scalar_lea.vmem %s7, %s282
      %s284 = smul.u32 2, %s18
      %v286 = vld [vmem:[%s277] sm:$0xff]
      %v287 = vld [vmem:[%s277 + $0x8] sm:$0xf]
      %v288 = vld [vmem:[%s277 + $0xc] sm:$0xff]
      %v289 = vld [vmem:[%s277 + $0x14] sm:$0xf]
      %v290 = vld [vmem:[%s1] sm:$0xf]
      %v291 = vld [vmem:[%s1 + $0x4] sm:$0xf]
      %v292 = vld [vmem:[%s1 + $0x8] sm:$0xf]
      %v293 = vld [vmem:[%s1 + $0xc] sm:$0xf]
      %v294 = vld [vmem:[%s1 + $0x10] sm:$0xf]
      %v295 = vld [vmem:[%s1 + $0x14] sm:$0xf]
      %v296 = vld [vmem:[%s1 + $0x18] sm:$0xf]
      %v297 = vld [vmem:[%s1 + $0x1c] sm:$0xf]
      %v298 = vld [vmem:[%s1 + $0x20] sm:$0xf]
      %v299 = vld [vmem:[%s1 + $0x24] sm:$0xf]
      %v300 = vld [vmem:[%s1 + $0x28] sm:$0xf]
      %v301 = vld [vmem:[%s1 + $0x2c] sm:$0xf]
      %v302 = vld [vmem:[%s1 + $0x30] sm:$0xf]
      %v303 = vld [vmem:[%s1 + $0x34] sm:$0xf]
      %v304 = vld [vmem:[%s1 + $0x38] sm:$0xf]
      %v305 = vld [vmem:[%s1 + $0x3c] sm:$0xf]
      %v306 = vld [vmem:[%s1 + $0x40] sm:$0xf]
      %v307 = vld [vmem:[%s1 + $0x44] sm:$0xf]
      %v308 = vld [vmem:[%s1 + $0x48] sm:$0xf]
      %v309 = vld [vmem:[%s1 + $0x4c] sm:$0xf]
      %v310 = vld [vmem:[%s1 + $0x50] sm:$0xf]
      %v311 = vld [vmem:[%s1 + $0x54] sm:$0xf]
      %v312 = vld [vmem:[%s1 + $0x58] sm:$0xf]
      %v313 = vld [vmem:[%s1 + $0x5c] sm:$0xf]
      %v314 = vld [vmem:[%s1 + $0x60] sm:$0xf]
      %v315 = vld [vmem:[%s1 + $0x64] sm:$0xf]
      %v316 = vld [vmem:[%s1 + $0x68] sm:$0xf]
      %v317 = vld [vmem:[%s1 + $0x6c] sm:$0xf]
      %v318 = vld [vmem:[%s1 + $0x70] sm:$0xf]
      %v319 = vld [vmem:[%s1 + $0x74] sm:$0xf]
      %v320 = vld [vmem:[%s1 + $0x78] sm:$0xf]
      %v321 = vld [vmem:[%s1 + $0x7c] sm:$0xf]
      %v322 = vld [vmem:[%s1 + $0x80] sm:$0xf]
      %v323 = vld [vmem:[%s1 + $0x84] sm:$0xf]
      %v324 = vld [vmem:[%s1 + $0x88] sm:$0xf]
      %v325 = vld [vmem:[%s1 + $0x8c] sm:$0xf]
      %v326 = vld [vmem:[%s1 + $0x90] sm:$0xf]
      %v327 = vld [vmem:[%s1 + $0x94] sm:$0xf]
      %v328 = vld [vmem:[%s1 + $0x98] sm:$0xf]
      %v329 = vld [vmem:[%s1 + $0x9c] sm:$0xf]
      %v330 = vld [vmem:[%s1 + $0xa0] sm:$0xf]
      %v331 = vld [vmem:[%s1 + $0xa4] sm:$0xf]
      %v332 = vld [vmem:[%s1 + $0xa8] sm:$0xf]
      %v333 = vld [vmem:[%s1 + $0xac] sm:$0xf]
      %v334 = vld [vmem:[%s2] sm:$0x1]
      %v336 = vperm.slane %v334, 0
      %v342 = vunpack.c.l.b16 %v286
      %v343 = vunpack.c.h.b16 %v286
      %v344 = vunpack.c.l.b16 %v287
      %v345 = vunpack.c.l.b16 %v288
      %v346 = vunpack.c.h.b16 %v288
      %v347 = vunpack.c.l.b16 %v289
      %v348 = vpack.c.b16 %v345, %v342
      %v349 = vpack.c.b16 %v346, %v343
      %v350 = vpack.c.b16 %v347, %v344
      %v397 = vunpack.c.l.b16 %v290
      %v398 = vunpack.c.l.b16 %v291
      %v399 = vunpack.c.l.b16 %v292
      %v400 = vunpack.c.l.b16 %v293
      %v401 = vunpack.c.l.b16 %v294
      %v402 = vunpack.c.l.b16 %v295
      %v403 = vunpack.c.l.b16 %v296
      %v404 = vunpack.c.l.b16 %v297
      %v405 = vunpack.c.l.b16 %v298
      %v406 = vunpack.c.l.b16 %v299
      %v407 = vunpack.c.l.b16 %v300
      %v408 = vunpack.c.l.b16 %v301
      %v409 = vunpack.c.l.b16 %v302
      %v410 = vunpack.c.l.b16 %v303
      %v411 = vunpack.c.l.b16 %v304
      %v412 = vunpack.c.l.b16 %v305
      %v413 = vunpack.c.l.b16 %v306
      %v414 = vunpack.c.l.b16 %v307
      %v415 = vunpack.c.l.b16 %v308
      %v416 = vunpack.c.l.b16 %v309
      %v417 = vunpack.c.l.b16 %v310
      %v418 = vunpack.c.l.b16 %v311
      %v419 = vunpack.c.l.b16 %v312
      %v420 = vunpack.c.l.b16 %v313
      %v421 = vunpack.c.l.b16 %v314
      %v422 = vunpack.c.l.b16 %v315
      %v423 = vunpack.c.l.b16 %v316
      %v424 = vunpack.c.l.b16 %v317
      %v425 = vunpack.c.l.b16 %v318
      %v426 = vunpack.c.l.b16 %v319
      %v427 = vunpack.c.l.b16 %v320
      %v428 = vunpack.c.l.b16 %v321
      %v429 = vunpack.c.l.b16 %v322
      %v430 = vunpack.c.l.b16 %v323
      %v431 = vunpack.c.l.b16 %v324
      %v432 = vunpack.c.l.b16 %v325
      %v433 = vunpack.c.l.b16 %v326
      %v434 = vunpack.c.l.b16 %v327
      %v435 = vunpack.c.l.b16 %v328
      %v436 = vunpack.c.l.b16 %v329
      %v437 = vunpack.c.l.b16 %v330
      %v438 = vunpack.c.l.b16 %v331
      %v439 = vunpack.c.l.b16 %v332
      %v440 = vunpack.c.l.b16 %v333
      %v441 = vpack.c.b16 %v398, %v397
      %v442 = vpack.c.b16 %v400, %v399
      %v443 = vpack.c.b16 %v402, %v401
      %v444 = vpack.c.b16 %v404, %v403
      %v445 = vpack.c.b16 %v406, %v405
      %v446 = vpack.c.b16 %v408, %v407
      %v447 = vpack.c.b16 %v410, %v409
      %v448 = vpack.c.b16 %v412, %v411
      %v449 = vpack.c.b16 %v414, %v413
      %v450 = vpack.c.b16 %v416, %v415
      %v451 = vpack.c.b16 %v418, %v417
      %v452 = vpack.c.b16 %v420, %v419
      %v453 = vpack.c.b16 %v422, %v421
      %v454 = vpack.c.b16 %v424, %v423
      %v455 = vpack.c.b16 %v426, %v425
      %v456 = vpack.c.b16 %v428, %v427
      %v457 = vpack.c.b16 %v430, %v429
      %v458 = vpack.c.b16 %v432, %v431
      %v459 = vpack.c.b16 %v434, %v433
      %v460 = vpack.c.b16 %v436, %v435
      %v461 = vpack.c.b16 %v438, %v437
      %v462 = vpack.c.b16 %v440, %v439
      %vm484 = vcmask 777216
      %v486 = vsel %vm484, %v350, 0
      %vm488 = vcmask 1046528
      %vm489 = vcmask 1047552
      %v490 = vsel %vm488, 4294967295, 65535
      %v491 = vsel %vm489, %v490, 0
      %v493 = vand.u32 %v462, %v491
      %495 = vmatpush.bf16.msra.mxu0 %v448
      %496 = vmatpush.bf16.msra.mxu0 %v447
      %497 = vmatpush.bf16.msra.mxu0 %v446
      %498 = vmatpush.bf16.msra.mxu0 %v445
      %499 = vmatpush.bf16.msra.mxu0 %v444
      %500 = vmatpush.bf16.msra.mxu0 %v443
      %501 = vmatpush.bf16.msra.mxu0 %v442
      %502 = vmatpush.bf16.msra.mxu0 %v441
      %503 = vmatmul.bf16.gmra.mxu0 %v348
      %v504 = vpop.f32.mrf.mxu0
      %v505 = vadd.f32 %v336, %v504
      %v506 = vpop.f32.mrf.mxu0
      %v507 = vadd.f32 %v336, %v506
      %508 = vdwg.mxu0
      %509 = vmatpush.bf16.msra.mxu0 %v456
      %510 = vmatpush.bf16.msra.mxu0 %v455
      %511 = vmatpush.bf16.msra.mxu0 %v454
      %512 = vmatpush.bf16.msra.mxu0 %v453
      %513 = vmatpush.bf16.msra.mxu0 %v452
      %514 = vmatpush.bf16.msra.mxu0 %v451
      %515 = vmatpush.bf16.msra.mxu0 %v450
      %516 = vmatpush.bf16.msra.mxu0 %v449
      %517 = vmatmul.bf16.gmra.mxu0 %v349
      %v518 = vpop.f32.mrf.mxu0
      %v519 = vadd.f32 %v505, %v518
      %v520 = vpop.f32.mrf.mxu0
      %v521 = vadd.f32 %v507, %v520
      %522 = vdwg.mxu0
      %523 = vmatpush.bf16.msra.mxu0 0
      %524 = vmatpush.bf16.msra.mxu0 0
      %525 = vmatpush.bf16.msra.mxu0 %v493
      %526 = vmatpush.bf16.msra.mxu0 %v461
      %527 = vmatpush.bf16.msra.mxu0 %v460
      %528 = vmatpush.bf16.msra.mxu0 %v459
      %529 = vmatpush.bf16.msra.mxu0 %v458
      %530 = vmatpush.bf16.msra.mxu0 %v457
      %531 = vmatmul.bf16.gmra.mxu0 %v486
      %v532 = vpop.f32.mrf.mxu0
      %v533 = vadd.f32 %v519, %v532
      %v534 = vpop.f32.mrf.mxu0
      %v535 = vadd.f32 %v521, %v534
      %536 = vdwg.mxu0
      %v537 = vmax.f32 %v533, 0.0
      %v538 = vmax.f32 %v535, 0.0
      %v539 = vpack.c.bf16 %v538, %v537
      %v540 = vld [vmem:[%s3] sm:$0xf]
      %v541 = vld [vmem:[%s3 + $0x4] sm:$0xf]
      %v542 = vld [vmem:[%s3 + $0x8] sm:$0xf]
      %v543 = vld [vmem:[%s3 + $0xc] sm:$0xf]
      %v544 = vld [vmem:[%s3 + $0x10] sm:$0xf]
      %v545 = vld [vmem:[%s3 + $0x14] sm:$0xf]
      %v546 = vld [vmem:[%s3 + $0x18] sm:$0xf]
      %v547 = vld [vmem:[%s3 + $0x1c] sm:$0xf]
      %v548 = vld [vmem:[%s4] sm:$0x1]
      %v550 = vperm.slane %v548, 0
      %v560 = vunpack.c.l.b16 %v540
      %v561 = vunpack.c.l.b16 %v541
      %v562 = vunpack.c.l.b16 %v542
      %v563 = vunpack.c.l.b16 %v543
      %v564 = vunpack.c.l.b16 %v544
      %v565 = vunpack.c.l.b16 %v545
      %v566 = vunpack.c.l.b16 %v546
      %v567 = vunpack.c.l.b16 %v547
      %v568 = vpack.c.b16 %v561, %v560
      %v569 = vpack.c.b16 %v563, %v562
      %v570 = vpack.c.b16 %v565, %v564
      %v571 = vpack.c.b16 %v567, %v566
      %vm576 = vcmask 523264
      %v578 = vsel %vm576, %v539, 0
      %580 = vmatpush.bf16.msra.mxu0 0
      %581 = vmatpush.bf16.msra.mxu0 0
      %582 = vmatpush.bf16.msra.mxu0 0
      %583 = vmatpush.bf16.msra.mxu0 0
      %584 = vmatpush.bf16.msra.mxu0 %v571
      %585 = vmatpush.bf16.msra.mxu0 %v570
      %586 = vmatpush.bf16.msra.mxu0 %v569
      %587 = vmatpush.bf16.msra.mxu0 %v568
      %588 = vmatmul.bf16.gmra.mxu0 %v578
      %v589 = vpop.f32.mrf.mxu0
      %v590 = vadd.f32 %v550, %v589
      %v591 = vpop.f32.mrf.mxu0
      %v592 = vadd.f32 %v550, %v591
      %593 = vdwg.mxu0
      %v594 = vmax.f32 %v590, 0.0
      %v595 = vmax.f32 %v592, 0.0
      %v596 = vpack.c.bf16 %v595, %v594
      %v597 = vld [vmem:[%s5] sm:$0xf]
      %v598 = vld [vmem:[%s5 + $0x4] sm:$0xf]
      %v599 = vld [vmem:[%s5 + $0x8] sm:$0xf]
      %v600 = vld [vmem:[%s5 + $0xc] sm:$0xf]
      %v601 = vld [vmem:[%s5 + $0x10] sm:$0xf]
      %v602 = vld [vmem:[%s5 + $0x14] sm:$0xf]
      %v603 = vld [vmem:[%s5 + $0x18] sm:$0xf]
      %v604 = vld [vmem:[%s5 + $0x1c] sm:$0xf]
      %v605 = vld [vmem:[%s6] sm:$0x1]
      %v607 = vperm.slane %v605, 0
      %v617 = vunpack.c.l.b16 %v597
      %v618 = vunpack.c.l.b16 %v598
      %v619 = vunpack.c.l.b16 %v599
      %v620 = vunpack.c.l.b16 %v600
      %v621 = vunpack.c.l.b16 %v601
      %v622 = vunpack.c.l.b16 %v602
      %v623 = vunpack.c.l.b16 %v603
      %v624 = vunpack.c.l.b16 %v604
      %v625 = vpack.c.b16 %v618, %v617
      %v626 = vpack.c.b16 %v620, %v619
      %v627 = vpack.c.b16 %v622, %v621
      %v628 = vpack.c.b16 %v624, %v623
      %v634 = vsel %vm576, %v596, 0
      %636 = vmatpush.bf16.msra.mxu0 0
      %637 = vmatpush.bf16.msra.mxu0 0
      %638 = vmatpush.bf16.msra.mxu0 0
      %639 = vmatpush.bf16.msra.mxu0 0
      %640 = vmatpush.bf16.msra.mxu0 %v628
      %641 = vmatpush.bf16.msra.mxu0 %v627
      %642 = vmatpush.bf16.msra.mxu0 %v626
      %643 = vmatpush.bf16.msra.mxu0 %v625
      %644 = vmatmul.bf16.gmra.mxu0 %v634
      %v645 = vpop.f32.mrf.mxu0
      %v646 = vadd.f32 %v607, %v645
      %v647 = vpop.f32.mrf.mxu0
      %v648 = vadd.f32 %v607, %v647
      %649 = vdwg.mxu0
      %vm650 = vcmask 146432
      %v651 = vsel %vm650, %v646, -inf
      %652 = vmax.xlane.f32.xlu0 %v651
      %v653 = vpop.xlane.xlu0 %652
      %v654 = vsel %vm650, %v648, -inf
      %655 = vmax.xlane.f32.xlu0 %v654
      %v656 = vpop.xlane.xlu0 %655
      %v657 = vsub.f32 %v646, %v653
      %v658 = vsub.f32 %v648, %v656
      %v659 = vmul.f32 %v657, 1.442695
      %v660 = vpow.pop %v659
      %v661 = vmul.f32 %v658, 1.442695
      %v662 = vpow.pop %v661
      %v663 = vsel %vm650, %v660, 0.0
      %664 = vadd.xlane.f32.xlu0 %v663
      %v665 = vpop.xlane.xlu0 %664
      %v666 = vsel %vm650, %v662, 0.0
      %667 = vadd.xlane.f32.xlu0 %v666
      %v668 = vpop.xlane.xlu0 %667
      %v669 = vrcp.pop %v665
      %v670 = vmul.f32 %v665, %v669
      %v671 = vsub.f32 1.0, %v670
      %v672 = vmul.f32 %v669, %v671
      %v673 = vadd.f32 %v669, %v672
      %vm674 = vweird.f32 %v665
      %vm675 = vweird.f32 %v669
      %vm676 = vmor %vm674, %vm675
      %v677 = vsel %vm676, %v669, %v673
      %v678 = vand.u32 2147483647, %v665
      %vm679 = vcmp.eq.f32.partialorder %v678, 8.507059e+37
      %v680 = vand.u32 %v665, 2147483648
      %v681 = vor.u32 1.1754944e-38, %v680
      %v682 = vsel %vm679, %v681, %v677
      %v683 = vrcp.pop %v668
      %v684 = vmul.f32 %v668, %v683
      %v685 = vsub.f32 1.0, %v684
      %v686 = vmul.f32 %v683, %v685
      %v687 = vadd.f32 %v683, %v686
      %vm688 = vweird.f32 %v668
      %vm689 = vweird.f32 %v683
      %vm690 = vmor %vm688, %vm689
      %v691 = vsel %vm690, %v683, %v687
      %v692 = vand.u32 2147483647, %v668
      %vm693 = vcmp.eq.f32.partialorder %v692, 8.507059e+37
      %v694 = vand.u32 %v668, 2147483648
      %v695 = vor.u32 1.1754944e-38, %v694
      %v696 = vsel %vm693, %v695, %v691
      %v697 = vmul.f32 %v660, %v682
      %v698 = vmul.f32 %v662, %v696
      %699 = vst.msk [vmem:[%s283] sm:$0xff] %vm650, %v697
      %700 = vst.msk [vmem:[%s283 + $0x8] sm:$0xff] %vm650, %v698
      %s701 = smul.u32 2, %s18
      %p702 = scmp.lt.s32.totalorder %s701, 3
      %s703 = scalar_select %p702, %s701, 3
      %s704 = smul.addr %s703, 8
      %s705 = scalar_lea.vmem %s7, %s704
      // Predicated region
      $region49: #{tpu_custom_call.1} parent=47 // pred_check
        %p706 = pneg %p188
      $region50: #{tpu_custom_call.1} parent=47 // pred_check_branch
        %708 = sbr.rel (%p706) target = $region52
      $region51: #{tpu_custom_call.1} parent=47 // pred_region
        %s709 = smul.u32 2, %s18
      $region52: #{tpu_custom_call.1} parent=47 // pred_fallthru
        _
    $region48: #{tpu_custom_call.1} parent=5 // pred_fallthru
      _
    %p710 = scmp.le.s32.totalorder 2, %s13
    // Predicated region
    $region53: #{tpu_custom_call.1} parent=5 // pred_check
      %p711 = pneg %p710
    $region54: #{tpu_custom_call.1} parent=5 // pred_check_branch
      %713 = sbr.rel (%p711) target = $region56
    $region55: #{tpu_custom_call.1} parent=5 // pred_region
      %s714 = ssub.s32 %s13, 2
      // Predicated region
      $region57: #{tpu_custom_call.1} parent=55 // pred_check
        %p715 = pneg %p194
      $region58: #{tpu_custom_call.1} parent=55 // pred_check_branch
        %717 = sbr.rel (%p715) target = $region60
      $region59: #{tpu_custom_call.1} parent=55 // pred_region
        %s718 = smul.u32 2, %s19
        %p719 = scmp.lt.s32.totalorder %s718, 3
        %s720 = scalar_select %p719, %s718, 3
        %s721 = smul.addr %s720, 8
        %s722 = scalar_lea.vmem %s7, %s721
      $region60: #{tpu_custom_call.1} parent=55 // pred_fallthru
        _
    $region56: #{tpu_custom_call.1} parent=5 // pred_fallthru
      _
  $region6: #{tpu_custom_call.1} parent=0 // loop_footer
    %s17 = sadd.s32 1, %s13
  $region7: #{tpu_custom_call.1} parent=0 // loop_footer_branch
    %12 = sbr.rel target = $region3
  $region8: #{tpu_custom_call.1} parent=0 // loop_exit
    _

</llo_original>
